<compile_context>
chip_gen: v6e
topology: v6e:2x2x1
jax: 0.10.0
libtpu: 0.0.40
codegen_flags: <defaults>
</compile_context>

<pallas_src>
import functools
import math

import jax
import jax.numpy as jnp
from jax.experimental import pallas as pl
from jax.experimental.pallas import tpu as pltpu


def _round_up(x, m):
    return ((x + m - 1) // m) * m


def _generator3d_kernel(seed_ref, x_ref, w1_ref, b1_ref, w2_ref, b2_ref, o_ref,
                        *, p, training):
    # One (TM, D) row tile through the fused MLP.
    x = x_ref[...]                                                  # (TM, D)
    h = jnp.dot(x, w1_ref[...], preferred_element_type=jnp.float32)  # MXU
    h = h + b1_ref[...]                                             # (TM,D)+(1,D)
    h = jnp.maximum(h, 0.0)                                         # ReLU (VPU)

    if training and p > 0.0:
        # Inverted dropout via the hardware PRNG; per-tile seed so each grid
        # step draws an independent mask.
        # TODO(synk): RNG stream differs from torch.nn.Dropout (not bit-exact).
        pltpu.prng_seed(seed_ref[0] + pl.program_id(0))
        bits = pltpu.prng_random_bits(h.shape)
        u = (bits & 0x00FFFFFF).astype(jnp.float32) * (1.0 / float(1 << 24))
        keep = (u >= p).astype(jnp.float32)
        h = h * keep * (1.0 / (1.0 - p))

    out = jnp.dot(h, w2_ref[...], preferred_element_type=jnp.float32)  # MXU
    out = out + b2_ref[...]                                            # (TM,T)+(1,T)
    o_ref[...] = out.astype(o_ref.dtype)


def generator3d_forward(x, w1, b1, w2, b2, *, dropout_p=0.0, training=False, seed=0):
    """x: (..., D) float32.  w1:(D,D) b1:(D,)  w2:(D,tgt) b2:(tgt,)."""
    orig_shape = x.shape
    D = orig_shape[-1]
    tgt = w2.shape[1]
    assert w1.shape == (D, D) and b1.shape == (D,)
    assert w2.shape == (D, tgt) and b2.shape == (tgt,)

    x2d = x.reshape(-1, D)
    N = x2d.shape[0]

    # Sublane-dense row tiles (multiple of 8), large enough to amortize the
    # per-grid-step overhead.
    TM = min(256, _round_up(N, 8))
    N_pad = _round_up(N, TM)
    if N_pad != N:
        x2d = jnp.pad(x2d, ((0, N_pad - N), (0, 0)))
    grid = (N_pad // TM,)

    b1_2d = b1.reshape(1, D)
    b2_2d = b2.reshape(1, tgt)
    seed_arr = jnp.asarray([seed], dtype=jnp.int32)

    # VMEM budget: double-buffered x/out tiles + resident weights/biases.
    itemsize = x.dtype.itemsize
    est = (2 * TM * (D + tgt) + D * D + D * tgt + D + tgt) * itemsize
    vmem_limit = int(min(48 << 20, max(16 << 20, 2 * est)))

    grid_spec = pltpu.PrefetchScalarGridSpec(
        num_scalar_prefetch=1,  # dropout seed (SMEM)
        grid=grid,
        in_specs=[
            pl.BlockSpec((TM, D), lambda i, seed: (i, 0)),     # x row tile
            pl.BlockSpec((D, D), lambda i, seed: (0, 0)),      # W1 (resident)
            pl.BlockSpec((1, D), lambda i, seed: (0, 0)),      # b1 (resident)
            pl.BlockSpec((D, tgt), lambda i, seed: (0, 0)),    # W2 (resident)
            pl.BlockSpec((1, tgt), lambda i, seed: (0, 0)),    # b2 (resident)
        ],
        out_specs=pl.BlockSpec((TM, tgt), lambda i, seed: (i, 0)),
    )

    out2d = pl.pallas_call(
        functools.partial(_generator3d_kernel,
                          p=float(dropout_p), training=bool(training)),
        out_shape=jax.ShapeDtypeStruct((N_pad, tgt), x.dtype),
        grid_spec=grid_spec,
        compiler_params=pltpu.CompilerParams(
            dimension_semantics=("parallel",),   # token-tile axis is independent
            vmem_limit_bytes=vmem_limit,
        ),
    )(seed_arr, x2d, w1, b1_2d, w2, b2_2d)

    out2d = out2d[:N]
    return out2d.reshape(*orig_shape[:-1], tgt)


if __name__ == "__main__":
    # Small deterministic setup consistent with Generator3D's forward.
    B, S = 2, 8
    embed_dim = 128
    tgt = 64
    dropout = 0.1  # module hyperparam; eval mode => dropout is identity

    key = jax.random.PRNGKey(0)
    kx, k1, kb1, k2, kb2 = jax.random.split(key, 5)

    x = jax.random.normal(kx, (B, S, embed_dim), dtype=jnp.float32)
    lim = 1.0 / math.sqrt(embed_dim)
    w1 = jax.random.uniform(k1, (embed_dim, embed_dim), jnp.float32, -lim, lim)
    b1 = jax.random.uniform(kb1, (embed_dim,), jnp.float32, -lim, lim)
    w2 = jax.random.uniform(k2, (embed_dim, tgt), jnp.float32, -lim, lim)
    b2 = jax.random.uniform(kb2, (tgt,), jnp.float32, -lim, lim)

    out = generator3d_forward(x, w1, b1, w2, b2, dropout_p=dropout, training=False)
    out = jax.block_until_ready(out)

    # Reference: plain JAX Linear -> ReLU -> (eval dropout = identity) -> Linear.
    h_ref = jnp.maximum(x.reshape(-1, embed_dim) @ w1 + b1, 0.0)
    ref = (h_ref @ w2 + b2).reshape(B, S, tgt)

    assert out.shape == (B, S, tgt)
    assert jnp.allclose(out, ref, atol=1e-4, rtol=1e-4)

    print("KERNEL_OK")
</pallas_src>

<mosaic_0001>
module attributes {stable_mosaic.version = 11 : i64} {
  func.func @_generator3d_kernel(%arg0: i32, %arg1: memref<1xi32, #tpu.memory_space<smem>>, %arg2: memref<16x128xf32, #tpu.memory_space<vmem>>, %arg3: memref<128x128xf32, #tpu.memory_space<vmem>>, %arg4: memref<1x128xf32, #tpu.memory_space<vmem>>, %arg5: memref<128x64xf32, #tpu.memory_space<vmem>>, %arg6: memref<1x64xf32, #tpu.memory_space<vmem>>, %arg7: memref<16x64xf32, #tpu.memory_space<vmem>>) attributes {dimension_semantics = [#tpu.dimension_semantics<parallel>], iteration_bounds = array<i64: 1>, scalar_prefetch = 1 : i64, scratch_operands = 0 : i64, tpu.core_type = #tpu.core_type<tc>, window_params = [{transform_indices = @transform_0, window_bounds = array<i64: 16, 128>}, {pipeline_mode = #tpu.pipeline_mode<synchronous>, transform_indices = @transform_1, window_bounds = array<i64: 128, 128>}, {pipeline_mode = #tpu.pipeline_mode<synchronous>, transform_indices = @transform_2, window_bounds = array<i64: 1, 128>}, {pipeline_mode = #tpu.pipeline_mode<synchronous>, transform_indices = @transform_3, window_bounds = array<i64: 128, 64>}, {pipeline_mode = #tpu.pipeline_mode<synchronous>, transform_indices = @transform_4, window_bounds = array<i64: 1, 64>}, {transform_indices = @transform_5, window_bounds = array<i64: 16, 64>}]} {
    %c0 = arith.constant 0 : index
    %c0_0 = arith.constant 0 : index
    %0 = vector.load %arg2[%c0, %c0_0] : memref<16x128xf32, #tpu.memory_space<vmem>>, vector<16x128xf32>
    %c0_1 = arith.constant 0 : index
    %c0_2 = arith.constant 0 : index
    %1 = vector.load %arg3[%c0_1, %c0_2] : memref<128x128xf32, #tpu.memory_space<vmem>>, vector<128x128xf32>
    %cst = arith.constant dense<0.000000e+00> : vector<16x128xf32>
    %2 = tpu.matmul %0, %1, %cst {dimension_numbers = #tpu.dot_dimension_numbers<[1], [0], [0], [1], [0, 0, 1, 1], [], []>} : vector<16x128xf32>, vector<128x128xf32>, vector<16x128xf32> -> vector<16x128xf32>
    %c0_3 = arith.constant 0 : index
    %c0_4 = arith.constant 0 : index
    %3 = vector.load %arg4[%c0_3, %c0_4] : memref<1x128xf32, #tpu.memory_space<vmem>>, vector<1x128xf32>
    %4 = vector.broadcast %3 : vector<1x128xf32> to vector<16x128xf32>
    %5 = arith.addf %2, %4 : vector<16x128xf32>
    %cst_5 = arith.constant 0.000000e+00 : f32
    %6 = vector.broadcast %cst_5 : f32 to vector<16x128xf32>
    %7 = arith.maximumf %5, %6 : vector<16x128xf32>
    %c0_6 = arith.constant 0 : index
    %c0_7 = arith.constant 0 : index
    %8 = vector.load %arg5[%c0_6, %c0_7] : memref<128x64xf32, #tpu.memory_space<vmem>>, vector<128x64xf32>
    %cst_8 = arith.constant dense<0.000000e+00> : vector<16x64xf32>
    %9 = tpu.matmul %7, %8, %cst_8 {dimension_numbers = #tpu.dot_dimension_numbers<[1], [0], [0], [1], [0, 0, 1, 1], [], []>} : vector<16x128xf32>, vector<128x64xf32>, vector<16x64xf32> -> vector<16x64xf32>
    %c0_9 = arith.constant 0 : index
    %c0_10 = arith.constant 0 : index
    %10 = vector.load %arg6[%c0_9, %c0_10] : memref<1x64xf32, #tpu.memory_space<vmem>>, vector<1x64xf32>
    %11 = vector.broadcast %10 : vector<1x64xf32> to vector<16x64xf32>
    %12 = arith.addf %9, %11 : vector<16x64xf32>
    %c0_11 = arith.constant 0 : index
    %c0_12 = arith.constant 0 : index
    %13 = vector.load %arg7[%c0_11, %c0_12] : memref<16x64xf32, #tpu.memory_space<vmem>>, vector<16x64xf32>
    tpu.vector_store %arg7[%c0_11, %c0_12], %12 {strides = array<i32>} : memref<16x64xf32, #tpu.memory_space<vmem>>, vector<16x64xf32>,
    return
  }
  func.func @transform_0(%arg0: i32, %arg1: memref<1xi32, #tpu.memory_space<smem>>) -> (i32, i32) {
    %c0_i32 = arith.constant 0 : i32
    %c0_i32_0 = arith.constant 0 : i32
    return %arg0, %c0_i32 : i32, i32
  }
  func.func @transform_1(%arg0: i32, %arg1: memref<1xi32, #tpu.memory_space<smem>>) -> (i32, i32) {
    %c0_i32 = arith.constant 0 : i32
    %c0_i32_0 = arith.constant 0 : i32
    %c0_i32_1 = arith.constant 0 : i32
    return %c0_i32, %c0_i32_0 : i32, i32
  }
  func.func @transform_2(%arg0: i32, %arg1: memref<1xi32, #tpu.memory_space<smem>>) -> (i32, i32) {
    %c0_i32 = arith.constant 0 : i32
    %c0_i32_0 = arith.constant 0 : i32
    %c0_i32_1 = arith.constant 0 : i32
    return %c0_i32, %c0_i32_0 : i32, i32
  }
  func.func @transform_3(%arg0: i32, %arg1: memref<1xi32, #tpu.memory_space<smem>>) -> (i32, i32) {
    %c0_i32 = arith.constant 0 : i32
    %c0_i32_0 = arith.constant 0 : i32
    %c0_i32_1 = arith.constant 0 : i32
    return %c0_i32, %c0_i32_0 : i32, i32
  }
  func.func @transform_4(%arg0: i32, %arg1: memref<1xi32, #tpu.memory_space<smem>>) -> (i32, i32) {
    %c0_i32 = arith.constant 0 : i32
    %c0_i32_0 = arith.constant 0 : i32
    %c0_i32_1 = arith.constant 0 : i32
    return %c0_i32, %c0_i32_0 : i32, i32
  }
  func.func @transform_5(%arg0: i32, %arg1: memref<1xi32, #tpu.memory_space<smem>>) -> (i32, i32) {
    %c0_i32 = arith.constant 0 : i32
    %c0_i32_0 = arith.constant 0 : i32
    return %arg0, %c0_i32 : i32, i32
  }
}

</mosaic_0001>

<llo_original>
// kernel: tpu_custom_call.1
$region0: #{tpu_custom_call.1}
  #allocation0 [shape = 'u32[]', space=smem, size = 0x4, offset = 0x4, fixed_abs, tag = 'smem constant byte address 0x4 - core index']
  #allocation1 [shape = 'u32[144,128]{1,0:T(1,128)}', space=vmem, size = 0x12000, scoped, tag = 'internal scratch']
  #allocation2 [shape = 's32[1]{0}', space=sflag, size = 0x4, scoped, tag = 'scoped memory for tpu_custom_call.1']
  #allocation3 [shape = 's32[1]{0:T(128)S(6)}', space=smem, size = 0x200, scoped, tag = 'prefetched SMEM operand 0']
  %s0 = inlined_call_operand.<no memory space> [shape: s32[1], index: 0, kind: input, shape index: {}]
  %s1 = inlined_call_operand.vmem [shape: f32[16,128], index: 1, kind: input, shape index: {}]
  %s2 = inlined_call_operand.vmem [shape: f32[128,128], index: 2, kind: input, shape index: {}]
  %s3 = inlined_call_operand.vmem [shape: f32[1,128], index: 3, kind: input, shape index: {}]
  %s4 = inlined_call_operand.vmem [shape: f32[128,64], index: 4, kind: input, shape index: {}]
  %s5 = inlined_call_operand.vmem [shape: f32[1,64], index: 5, kind: input, shape index: {}]
  %s6 = inlined_call_operand.hbm [shape: f32[16,64], index: 6, kind: output, shape index: {}]
  %s7 = sld [smem:[#allocation0]]
  $region30: #{tpu_custom_call.1} parent=0
    _
  %s9 = ssub.s32 1, %s7
  %s10 = scalar_select 0, %s9, %s7
  %11 = sst [smem:[#allocation3]] %s0
  $region1: #{tpu_custom_call.1} parent=0
    #allocation4 [shape = 'u8[8192]{0}', space=vmem, size = 0x2000, scoped, tag = 'output window, operand 0, single buffered']
    #allocation5 [shape = 's32[1]{0}', space=sflag, size = 0x4, scoped, tag = 'scoped memory for tpu_custom_call.1']
    %12 = vsyncpa [#allocation5], 0
    // Predicated region
    $region2: #{tpu_custom_call.1} parent=1 // pred_check
      _
    $region3: #{tpu_custom_call.1} parent=1 // pred_check_branch
      %14 = sbr.rel (0) target = $region5
    $region4: #{tpu_custom_call.1} parent=1 // pred_region
      _
    $region5: #{tpu_custom_call.1} parent=1 // pred_fallthru
      _
    // Predicated region
    $region6: #{tpu_custom_call.1} parent=1 // pred_check
      _
    $region7: #{tpu_custom_call.1} parent=1 // pred_check_branch
      %16 = sbr.rel (0) target = $region9
    $region8: #{tpu_custom_call.1} parent=1 // pred_region
      _
    $region9: #{tpu_custom_call.1} parent=1 // pred_fallthru
      _
    // Predicated region
    $region10: #{tpu_custom_call.1} parent=1 // pred_check
      _
    $region11: #{tpu_custom_call.1} parent=1 // pred_check_branch
      %18 = sbr.rel (0) target = $region13
    $region12: #{tpu_custom_call.1} parent=1 // pred_region
      _
    $region13: #{tpu_custom_call.1} parent=1 // pred_fallthru
      _
    // Predicated region
    $region14: #{tpu_custom_call.1} parent=1 // pred_check
      _
    $region15: #{tpu_custom_call.1} parent=1 // pred_check_branch
      %20 = sbr.rel (0) target = $region17
    $region16: #{tpu_custom_call.1} parent=1 // pred_region
      _
    $region17: #{tpu_custom_call.1} parent=1 // pred_fallthru
      _
    // Predicated region
    $region18: #{tpu_custom_call.1} parent=1 // pred_check
      _
    $region19: #{tpu_custom_call.1} parent=1 // pred_check_branch
      %22 = sbr.rel (0) target = $region21
    $region20: #{tpu_custom_call.1} parent=1 // pred_region
      _
    $region21: #{tpu_custom_call.1} parent=1 // pred_fallthru
      _
    %v23 = vld [vmem:[%s1] sm:$0xff]
    %v24 = vld [vmem:[%s1 + $0x8] sm:$0xff]
    %v25 = vld [vmem:[%s2] sm:$0xff]
    %v26 = vld [vmem:[%s2 + $0x8] sm:$0xff]
    %v27 = vld [vmem:[%s2 + $0x10] sm:$0xff]
    %v28 = vld [vmem:[%s2 + $0x18] sm:$0xff]
    %v29 = vld [vmem:[%s2 + $0x20] sm:$0xff]
    %v30 = vld [vmem:[%s2 + $0x28] sm:$0xff]
    %v31 = vld [vmem:[%s2 + $0x30] sm:$0xff]
    %v32 = vld [vmem:[%s2 + $0x38] sm:$0xff]
    %v33 = vld [vmem:[%s2 + $0x40] sm:$0xff]
    %v34 = vld [vmem:[%s2 + $0x48] sm:$0xff]
    %v35 = vld [vmem:[%s2 + $0x50] sm:$0xff]
    %v36 = vld [vmem:[%s2 + $0x58] sm:$0xff]
    %v37 = vld [vmem:[%s2 + $0x60] sm:$0xff]
    %v38 = vld [vmem:[%s2 + $0x68] sm:$0xff]
    %v39 = vld [vmem:[%s2 + $0x70] sm:$0xff]
    %v40 = vld [vmem:[%s2 + $0x78] sm:$0xff]
    %v41 = vld [vmem:[%s3] sm:$0x1]
    %v43 = vlaneseq
    %v44 = vshrl.u32 %v43, 7
    %v45 = vsub.s32 0, %v44
    %v46 = vrot.slane %v41, %v45
    %48 = vmatprep.subr.mxu0 0.0
    %49 = vmatpush1.msra.mxu0 %v40
    %50 = vmatprep.subr.mxu0 0.0
    %51 = vmatpush1.msra.mxu0 %v39
    %52 = vmatprep.subr.mxu0 0.0
    %53 = vmatpush1.msra.mxu0 %v38
    %54 = vmatprep.subr.mxu0 0.0
    %55 = vmatpush1.msra.mxu0 %v37
    %56 = vmatprep.subr.mxu0 0.0
    %57 = vmatpush1.msra.mxu0 %v36
    %58 = vmatprep.subr.mxu0 0.0
    %59 = vmatpush1.msra.mxu0 %v35
    %60 = vmatprep.subr.mxu0 0.0
    %61 = vmatpush1.msra.mxu0 %v34
    %62 = vmatprep.subr.mxu0 0.0
    %63 = vmatpush1.msra.mxu0 %v33
    %64 = vmatprep.subr.mxu0 0.0
    %65 = vmatpush1.msra.mxu0 %v32
    %66 = vmatprep.subr.mxu0 0.0
    %67 = vmatpush1.msra.mxu0 %v31
    %68 = vmatprep.subr.mxu0 0.0
    %69 = vmatpush1.msra.mxu0 %v30
    %70 = vmatprep.subr.mxu0 0.0
    %71 = vmatpush1.msra.mxu0 %v29
    %72 = vmatprep.subr.mxu0 0.0
    %73 = vmatpush1.msra.mxu0 %v28
    %74 = vmatprep.subr.mxu0 0.0
    %75 = vmatpush1.msra.mxu0 %v27
    %76 = vmatprep.subr.mxu0 0.0
    %77 = vmatpush1.msra.mxu0 %v26
    %78 = vmatprep.subr.mxu0 0.0
    %79 = vmatpush1.msra.mxu0 %v25
    %80 = vmatprep.subr.mxu0 0.0
    %81 = vmatpush2.msra.mxu0 0.0
    %82 = vmatprep.subr.mxu0 0.0
    %83 = vmatpush2.msra.mxu0 0.0
    %84 = vmatprep.subr.mxu0 0.0
    %85 = vmatpush2.msra.mxu0 0.0
    %86 = vmatprep.subr.mxu0 0.0
    %87 = vmatpush2.msra.mxu0 0.0
    %88 = vmatprep.subr.mxu0 0.0
    %89 = vmatpush2.msra.mxu0 0.0
    %90 = vmatprep.subr.mxu0 0.0
    %91 = vmatpush2.msra.mxu0 0.0
    %92 = vmatprep.subr.mxu0 0.0
    %93 = vmatpush2.msra.mxu0 0.0
    %94 = vmatprep.subr.mxu0 0.0
    %95 = vmatpush2.msra.mxu0 0.0
    %96 = vmatprep.subr.mxu0 0.0
    %97 = vmatpush2.msra.mxu0 0.0
    %98 = vmatprep.subr.mxu0 0.0
    %99 = vmatpush2.msra.mxu0 0.0
    %100 = vmatprep.subr.mxu0 0.0
    %101 = vmatpush2.msra.mxu0 0.0
    %102 = vmatprep.subr.mxu0 0.0
    %103 = vmatpush2.msra.mxu0 0.0
    %104 = vmatprep.subr.mxu0 0.0
    %105 = vmatpush2.msra.mxu0 0.0
    %106 = vmatprep.subr.mxu0 0.0
    %107 = vmatpush2.msra.mxu0 0.0
    %108 = vmatprep.subr.mxu0 0.0
    %109 = vmatpush2.msra.mxu0 0.0
    %110 = vmatprep.subr.mxu0 0.0
    %111 = vmatpush2.msra.mxu0 0.0
    %112 = vmatprep.mubr.f32.mxu0 0.0
    %113 = vmatmul.mubr.f32.gmra.mxu0 %v23
    %v114 = vpop.f32.mrf.mxu0
    %v115 = vadd.f32 %v46, %v114
    %v116 = vpop.f32.mrf.mxu0
    %117 = vmatprep.mubr.f32.mxu0 0.0
    %118 = vmatmul.mubr.f32.gmra.mxu0 %v24
    %v119 = vpop.f32.mrf.mxu0
    %v120 = vadd.f32 %v46, %v119
    %v121 = vpop.f32.mrf.mxu0
    %122 = vdwg.mxu0
    %v123 = vmax.f32 %v115, 0.0
    %v124 = vmax.f32 %v120, 0.0
    %v125 = vld [vmem:[%s4] sm:$0xff]
    %v126 = vld [vmem:[%s4 + $0x8] sm:$0xff]
    %v127 = vld [vmem:[%s4 + $0x10] sm:$0xff]
    %v128 = vld [vmem:[%s4 + $0x18] sm:$0xff]
    %v129 = vld [vmem:[%s4 + $0x20] sm:$0xff]
    %v130 = vld [vmem:[%s4 + $0x28] sm:$0xff]
    %v131 = vld [vmem:[%s4 + $0x30] sm:$0xff]
    %v132 = vld [vmem:[%s4 + $0x38] sm:$0xff]
    %v133 = vld [vmem:[%s4 + $0x40] sm:$0xff]
    %v134 = vld [vmem:[%s4 + $0x48] sm:$0xff]
    %v135 = vld [vmem:[%s4 + $0x50] sm:$0xff]
    %v136 = vld [vmem:[%s4 + $0x58] sm:$0xff]
    %v137 = vld [vmem:[%s4 + $0x60] sm:$0xff]
    %v138 = vld [vmem:[%s4 + $0x68] sm:$0xff]
    %v139 = vld [vmem:[%s4 + $0x70] sm:$0xff]
    %v140 = vld [vmem:[%s4 + $0x78] sm:$0xff]
    %v141 = vld [vmem:[%s5] sm:$0x1]
    %v143 = vlaneseq
    %v144 = vshrl.u32 %v143, 7
    %v145 = vsub.s32 0, %v144
    %v146 = vrot.slane %v141, %v145
    %148 = vmatprep.subr.mxu0 0.0
    %149 = vmatpush1.msra.mxu0 %v140
    %150 = vmatprep.subr.mxu0 0.0
    %151 = vmatpush1.msra.mxu0 %v139
    %152 = vmatprep.subr.mxu0 0.0
    %153 = vmatpush1.msra.mxu0 %v138
    %154 = vmatprep.subr.mxu0 0.0
    %155 = vmatpush1.msra.mxu0 %v137
    %156 = vmatprep.subr.mxu0 0.0
    %157 = vmatpush1.msra.mxu0 %v136
    %158 = vmatprep.subr.mxu0 0.0
    %159 = vmatpush1.msra.mxu0 %v135
    %160 = vmatprep.subr.mxu0 0.0
    %161 = vmatpush1.msra.mxu0 %v134
    %162 = vmatprep.subr.mxu0 0.0
    %163 = vmatpush1.msra.mxu0 %v133
    %164 = vmatprep.subr.mxu0 0.0
    %165 = vmatpush1.msra.mxu0 %v132
    %166 = vmatprep.subr.mxu0 0.0
    %167 = vmatpush1.msra.mxu0 %v131
    %168 = vmatprep.subr.mxu0 0.0
    %169 = vmatpush1.msra.mxu0 %v130
    %170 = vmatprep.subr.mxu0 0.0
    %171 = vmatpush1.msra.mxu0 %v129
    %172 = vmatprep.subr.mxu0 0.0
    %173 = vmatpush1.msra.mxu0 %v128
    %174 = vmatprep.subr.mxu0 0.0
    %175 = vmatpush1.msra.mxu0 %v127
    %176 = vmatprep.subr.mxu0 0.0
    %177 = vmatpush1.msra.mxu0 %v126
    %178 = vmatprep.subr.mxu0 0.0
    %179 = vmatpush1.msra.mxu0 %v125
    %180 = vmatprep.subr.mxu0 0.0
    %181 = vmatpush2.msra.mxu0 0.0
    %182 = vmatprep.subr.mxu0 0.0
    %183 = vmatpush2.msra.mxu0 0.0
    %184 = vmatprep.subr.mxu0 0.0
    %185 = vmatpush2.msra.mxu0 0.0
    %186 = vmatprep.subr.mxu0 0.0
    %187 = vmatpush2.msra.mxu0 0.0
    %188 = vmatprep.subr.mxu0 0.0
    %189 = vmatpush2.msra.mxu0 0.0
    %190 = vmatprep.subr.mxu0 0.0
    %191 = vmatpush2.msra.mxu0 0.0
    %192 = vmatprep.subr.mxu0 0.0
    %193 = vmatpush2.msra.mxu0 0.0
    %194 = vmatprep.subr.mxu0 0.0
    %195 = vmatpush2.msra.mxu0 0.0
    %196 = vmatprep.subr.mxu0 0.0
    %197 = vmatpush2.msra.mxu0 0.0
    %198 = vmatprep.subr.mxu0 0.0
    %199 = vmatpush2.msra.mxu0 0.0
    %200 = vmatprep.subr.mxu0 0.0
    %201 = vmatpush2.msra.mxu0 0.0
    %202 = vmatprep.subr.mxu0 0.0
    %203 = vmatpush2.msra.mxu0 0.0
    %204 = vmatprep.subr.mxu0 0.0
    %205 = vmatpush2.msra.mxu0 0.0
    %206 = vmatprep.subr.mxu0 0.0
    %207 = vmatpush2.msra.mxu0 0.0
    %208 = vmatprep.subr.mxu0 0.0
    %209 = vmatpush2.msra.mxu0 0.0
    %210 = vmatprep.subr.mxu0 0.0
    %211 = vmatpush2.msra.mxu0 0.0
    %212 = vmatprep.mubr.f32.mxu0 0.0
    %213 = vmatmul.mubr.f32.gmra.mxu0 %v123
    %v214 = vpop.f32.mrf.mxu0
    %v215 = vadd.f32 %v146, %v214
    %v216 = vpop.f32.mrf.mxu0
    %217 = vmatprep.mubr.f32.mxu0 0.0
    %218 = vmatmul.mubr.f32.gmra.mxu0 %v124
    %v219 = vpop.f32.mrf.mxu0
    %v220 = vadd.f32 %v146, %v219
    %v221 = vpop.f32.mrf.mxu0
    %222 = vdwg.mxu0
    %vm223 = vcmask 523264
    %224 = vst.msk [vmem:[#allocation4] sm:$0xff] %vm223, %v215
    %225 = vst.msk [vmem:[#allocation4 + $0x8] sm:$0xff] %vm223, %v220
    // Predicated region
    $region22: #{tpu_custom_call.1} parent=1 // pred_check
      _
    $region23: #{tpu_custom_call.1} parent=1 // pred_check_branch
      %227 = sbr.rel (0) target = $region25
    $region24: #{tpu_custom_call.1} parent=1 // pred_region
      %s229 = ssub.s32 256, 256
      %230 = vsyncadd [#allocation5], %s229
      %s231 = sshll.u32 [#allocation4], 4
      %s232 = int_to_ptr.vmem [resolvable:$true] %s231
      %237 = dma.vmem_to_hbm [thread:$0]  %s232, 256, %s6, [#allocation5], 128, 128, 8
    $region25: #{tpu_custom_call.1} parent=1 // pred_fallthru
      _
    // Predicated region
    $region26: #{tpu_custom_call.1} parent=1 // pred_check
      _
    $region27: #{tpu_custom_call.1} parent=1 // pred_check_branch
      %239 = sbr.rel (0) target = $region29
    $region28: #{tpu_custom_call.1} parent=1 // pred_region
      %240 = dma.done [#allocation5], 256
    $region29: #{tpu_custom_call.1} parent=1 // pred_fallthru
      _
    %241 = vsyncpa [#allocation5], 1

</llo_original>
